<compile_context>
chip_gen: v6e
topology: v6e:2x2x1
jax: 0.10.0
libtpu: 0.0.40
codegen_flags: <defaults>
</compile_context>

<pallas_src>
import functools

import jax
import jax.numpy as jnp
from jax.experimental import pallas as pl
from jax.experimental.pallas import tpu as pltpu

LANE = 128                 # lane width for hidden-dim padding
DEFAULT_MAX_TILE_B = 1024  # target batch tile (multiple of 8)


def _round_up(n, m):
    return ((n + m - 1) // m) * m


def _default_act_dtype():
    """bf16 activations (EUP/VPU bf16 path) on v6e/v7x; f32 elsewhere."""
    try:
        kind = jax.devices()[0].device_kind.lower()
    except Exception:
        return jnp.float32
    for tag in ("v6", "v7", "trillium"):
        if tag in kind:
            return jnp.bfloat16
    return jnp.float32


def _choose_tile_b(batch, max_tile):
    """Large tile (amortize ~0.35us/grid-step), multiple of 8; when the batch
    splits, keep the tile count even + balanced for v7x's two TensorCores."""
    if batch <= 8:
        return 8
    n_tiles = max(1, -(-batch // max_tile))
    if batch >= 512 and n_tiles < 2:
        n_tiles = 2            # give v7x's 2nd TC work; ~free elsewhere
    if n_tiles > 1 and n_tiles % 2:
        n_tiles += 1           # even tile count -> balanced across 2 TCs
    return _round_up(-(-batch // n_tiles), 8)


def _mlp_kernel(x_ref,
                w1_ref, b1_ref,
                w2_ref, b2_ref,
                w3_ref, b3_ref,
                w4_ref, b4_ref,
                o_ref, *, act_dtype):
    """One batch tile: 4 x (bf16 matmul, f32 acc, bias, tanh) + tanh-form sigmoid."""

    def layer(h, w_ref, b_ref):
        acc = jnp.dot(h.astype(jnp.bfloat16), w_ref[...],
                      preferred_element_type=jnp.float32)
        return jnp.tanh((acc + b_ref[...]).astype(act_dtype))

    h = layer(x_ref[...], w1_ref, b1_ref)   # fc1 + tanh
    h = layer(h, w2_ref, b2_ref)            # fc2 + tanh
    h = layer(h, w3_ref, b3_ref)            # fc3 + tanh
    h = layer(h, w4_ref, b4_ref)            # fc4 + tanh
    # sigmoid(h) == 0.5 * (tanh(0.5*h) + 1): a single EUP pass (no exp+divide).
    half = jnp.asarray(0.5, h.dtype)
    one = jnp.asarray(1.0, h.dtype)
    o_ref[...] = (half * (jnp.tanh(half * h) + one)).astype(o_ref.dtype)


def init_params(key, input_dim, h1, h2, h3, out_dim):
    """PyTorch-Linear-style init. Weights stored as [in, out], biases [1, out]."""
    dims = [(input_dim, h1), (h1, h2), (h2, h3), (h3, out_dim)]
    params = {}
    for idx, (din, dout) in enumerate(dims, start=1):
        key, kw, kb = jax.random.split(key, 3)
        bound = 1.0 / jnp.sqrt(jnp.float32(din))
        params[f"w{idx}"] = jax.random.uniform(
            kw, (din, dout), jnp.float32, minval=-bound, maxval=bound)
        params[f"b{idx}"] = jax.random.uniform(
            kb, (1, dout), jnp.float32, minval=-bound, maxval=bound)
    return params


def pack_params(params):
    """Pad HIDDEN feature dims to 128 lanes (zero padding is inert: tanh(0)=0
    and the padded K-rows of the next weight are zero).  w1 keeps the real
    input K and w4 keeps the real output N so the kernel DMAs no padded x
    columns and writes no padded output lanes.  Weights -> bf16 (MXU
    operands); biases stay f32."""
    packed = {}
    for i in range(1, 5):
        w = params[f"w{i}"]
        b = params[f"b{i}"].reshape(1, -1)
        din, dout = w.shape
        dinp = din if i == 1 else _round_up(din, LANE)
        doutp = dout if i == 4 else _round_up(dout, LANE)
        wp = jnp.zeros((dinp, doutp), jnp.float32).at[:din, :dout].set(w)
        bp = jnp.zeros((1, doutp), jnp.float32).at[:, :dout].set(b)
        packed[f"w{i}"] = wp.astype(jnp.bfloat16)
        packed[f"b{i}"] = bp
    return packed


@functools.partial(jax.jit, static_argnames=("act_dtype", "max_tile_b"))
def feedforward_mlp(x, packed, act_dtype=None, max_tile_b=DEFAULT_MAX_TILE_B):
    """x: [B, input_dim] f32.  packed: output of pack_params().
    Returns [B, out_dim] f32."""
    if act_dtype is None:
        act_dtype = _default_act_dtype()

    B, in_dim = x.shape
    assert packed["w1"].shape[0] == in_dim, "x feature dim mismatch"
    out_dim = packed["w4"].shape[1]

    tile_b = _choose_tile_b(B, max_tile_b)
    grid = (pl.cdiv(B, tile_b),)

    operands = (x,
                packed["w1"], packed["b1"],
                packed["w2"], packed["b2"],
                packed["w3"], packed["b3"],
                packed["w4"], packed["b4"])

    # Weights/biases: full-array blocks with constant index maps -> VMEM-resident.
    resident = lambda a: pl.BlockSpec(a.shape, lambda i: (0, 0))

    return pl.pallas_call(
        functools.partial(_mlp_kernel, act_dtype=act_dtype),
        out_shape=jax.ShapeDtypeStruct((B, out_dim), jnp.float32),
        grid_spec=pltpu.PrefetchScalarGridSpec(
            num_scalar_prefetch=0,
            grid=grid,
            in_specs=[pl.BlockSpec((tile_b, in_dim), lambda i: (i, 0))]
                     + [resident(a) for a in operands[1:]],
            out_specs=pl.BlockSpec((tile_b, out_dim), lambda i: (i, 0)),
        ),
        compiler_params=pltpu.CompilerParams(
            dimension_semantics=("parallel",)),   # shard batch tiles across TCs on v7x
    )(*operands)


def _reference_f32(x, params):
    h = x
    for i in range(1, 5):
        h = jnp.tanh(h @ params[f"w{i}"] + params[f"b{i}"])
    return jax.nn.sigmoid(h)


def _reference_policy(x, params, act_dtype):
    """Matches the kernel's dtype policy: bf16 matmul operands, f32 accum,
    act_dtype tanh, tanh-form sigmoid."""
    h = x
    for i in range(1, 5):
        acc = jnp.dot(h.astype(jnp.bfloat16),
                      params[f"w{i}"].astype(jnp.bfloat16),
                      preferred_element_type=jnp.float32)
        h = jnp.tanh((acc + params[f"b{i}"]).astype(act_dtype))
    half = jnp.asarray(0.5, h.dtype)
    one = jnp.asarray(1.0, h.dtype)
    return (half * (jnp.tanh(half * h) + one)).astype(jnp.float32)


if __name__ == "__main__":
    key = jax.random.PRNGKey(0)
    key, kx, kx2 = jax.random.split(key, 3)

    # Small shapes consistent with the module's forward pass.
    batch, input_dim = 8, 32
    h1, h2, h3, out_dim = 64, 64, 32, 16

    params = init_params(key, input_dim, h1, h2, h3, out_dim)
    packed = pack_params(params)
    act_dtype = _default_act_dtype()

    # --- small-batch run ---
    x = jax.random.normal(kx, (batch, input_dim), jnp.float32)
    out = jax.block_until_ready(feedforward_mlp(x, packed, act_dtype=act_dtype))
    assert out.shape == (batch, out_dim)
    assert jnp.allclose(out, _reference_f32(x, params), atol=4e-2), \
        "mismatch vs f32 reference"
    assert jnp.allclose(out, _reference_policy(x, params, act_dtype), atol=1.5e-2), \
        "mismatch vs dtype-matched reference"

    # --- multi-tile run (exercises batch tiling + ragged last block) ---
    batch2 = 1040   # splits into 2 balanced tiles of 520 rows
    x2 = jax.random.normal(kx2, (batch2, input_dim), jnp.float32)
    out2 = jax.block_until_ready(feedforward_mlp(x2, packed, act_dtype=act_dtype))
    assert out2.shape == (batch2, out_dim)
    assert jnp.allclose(out2, _reference_f32(x2, params), atol=4e-2), \
        "multi-tile mismatch vs f32 reference"
    assert jnp.allclose(out2, _reference_policy(x2, params, act_dtype), atol=1.5e-2), \
        "multi-tile mismatch vs dtype-matched reference"

    print("KERNEL_OK")
</pallas_src>

<mosaic_0001>
module attributes {stable_mosaic.version = 11 : i64} {
  func.func @_mlp_kernel(%arg0: i32, %arg1: memref<8x32xf32, #tpu.memory_space<vmem>>, %arg2: memref<32x128xbf16, #tpu.memory_space<vmem>>, %arg3: memref<1x128xf32, #tpu.memory_space<vmem>>, %arg4: memref<128x128xbf16, #tpu.memory_space<vmem>>, %arg5: memref<1x128xf32, #tpu.memory_space<vmem>>, %arg6: memref<128x128xbf16, #tpu.memory_space<vmem>>, %arg7: memref<1x128xf32, #tpu.memory_space<vmem>>, %arg8: memref<128x16xbf16, #tpu.memory_space<vmem>>, %arg9: memref<1x16xf32, #tpu.memory_space<vmem>>, %arg10: memref<8x16xf32, #tpu.memory_space<vmem>>) attributes {dimension_semantics = [#tpu.dimension_semantics<parallel>], iteration_bounds = array<i64: 1>, scalar_prefetch = 0 : i64, scratch_operands = 0 : i64, tpu.core_type = #tpu.core_type<tc>, window_params = [{transform_indices = @transform_0, window_bounds = array<i64: 8, 32>}, {pipeline_mode = #tpu.pipeline_mode<synchronous>, transform_indices = @transform_1, window_bounds = array<i64: 32, 128>}, {pipeline_mode = #tpu.pipeline_mode<synchronous>, transform_indices = @transform_2, window_bounds = array<i64: 1, 128>}, {pipeline_mode = #tpu.pipeline_mode<synchronous>, transform_indices = @transform_3, window_bounds = array<i64: 128, 128>}, {pipeline_mode = #tpu.pipeline_mode<synchronous>, transform_indices = @transform_4, window_bounds = array<i64: 1, 128>}, {pipeline_mode = #tpu.pipeline_mode<synchronous>, transform_indices = @transform_5, window_bounds = array<i64: 128, 128>}, {pipeline_mode = #tpu.pipeline_mode<synchronous>, transform_indices = @transform_6, window_bounds = array<i64: 1, 128>}, {pipeline_mode = #tpu.pipeline_mode<synchronous>, transform_indices = @transform_7, window_bounds = array<i64: 128, 16>}, {pipeline_mode = #tpu.pipeline_mode<synchronous>, transform_indices = @transform_8, window_bounds = array<i64: 1, 16>}, {transform_indices = @transform_9, window_bounds = array<i64: 8, 16>}]} {
    %c0 = arith.constant 0 : index
    %c0_0 = arith.constant 0 : index
    %0 = vector.load %arg1[%c0, %c0_0] : memref<8x32xf32, #tpu.memory_space<vmem>>, vector<8x32xf32>
    %1 = arith.truncf %0 : vector<8x32xf32> to vector<8x32xbf16>
    %c0_1 = arith.constant 0 : index
    %c0_2 = arith.constant 0 : index
    %2 = vector.load %arg2[%c0_1, %c0_2] : memref<32x128xbf16, #tpu.memory_space<vmem>>, vector<32x128xbf16>
    %cst = arith.constant dense<0.000000e+00> : vector<8x128xf32>
    %3 = tpu.matmul %1, %2, %cst {dimension_numbers = #tpu.dot_dimension_numbers<[1], [0], [0], [1], [0, 0, 1, 1], [], []>} : vector<8x32xbf16>, vector<32x128xbf16>, vector<8x128xf32> -> vector<8x128xf32>
    %c0_3 = arith.constant 0 : index
    %c0_4 = arith.constant 0 : index
    %4 = vector.load %arg3[%c0_3, %c0_4] : memref<1x128xf32, #tpu.memory_space<vmem>>, vector<1x128xf32>
    %5 = vector.broadcast %4 : vector<1x128xf32> to vector<8x128xf32>
    %6 = arith.addf %3, %5 : vector<8x128xf32>
    %7 = math.tanh %6 : vector<8x128xf32>
    %8 = arith.truncf %7 : vector<8x128xf32> to vector<8x128xbf16>
    %c0_5 = arith.constant 0 : index
    %c0_6 = arith.constant 0 : index
    %9 = vector.load %arg4[%c0_5, %c0_6] : memref<128x128xbf16, #tpu.memory_space<vmem>>, vector<128x128xbf16>
    %cst_7 = arith.constant dense<0.000000e+00> : vector<8x128xf32>
    %10 = tpu.matmul %8, %9, %cst_7 {dimension_numbers = #tpu.dot_dimension_numbers<[1], [0], [0], [1], [0, 0, 1, 1], [], []>} : vector<8x128xbf16>, vector<128x128xbf16>, vector<8x128xf32> -> vector<8x128xf32>
    %c0_8 = arith.constant 0 : index
    %c0_9 = arith.constant 0 : index
    %11 = vector.load %arg5[%c0_8, %c0_9] : memref<1x128xf32, #tpu.memory_space<vmem>>, vector<1x128xf32>
    %12 = vector.broadcast %11 : vector<1x128xf32> to vector<8x128xf32>
    %13 = arith.addf %10, %12 : vector<8x128xf32>
    %14 = math.tanh %13 : vector<8x128xf32>
    %15 = arith.truncf %14 : vector<8x128xf32> to vector<8x128xbf16>
    %c0_10 = arith.constant 0 : index
    %c0_11 = arith.constant 0 : index
    %16 = vector.load %arg6[%c0_10, %c0_11] : memref<128x128xbf16, #tpu.memory_space<vmem>>, vector<128x128xbf16>
    %cst_12 = arith.constant dense<0.000000e+00> : vector<8x128xf32>
    %17 = tpu.matmul %15, %16, %cst_12 {dimension_numbers = #tpu.dot_dimension_numbers<[1], [0], [0], [1], [0, 0, 1, 1], [], []>} : vector<8x128xbf16>, vector<128x128xbf16>, vector<8x128xf32> -> vector<8x128xf32>
    %c0_13 = arith.constant 0 : index
    %c0_14 = arith.constant 0 : index
    %18 = vector.load %arg7[%c0_13, %c0_14] : memref<1x128xf32, #tpu.memory_space<vmem>>, vector<1x128xf32>
    %19 = vector.broadcast %18 : vector<1x128xf32> to vector<8x128xf32>
    %20 = arith.addf %17, %19 : vector<8x128xf32>
    %21 = math.tanh %20 : vector<8x128xf32>
    %22 = arith.truncf %21 : vector<8x128xf32> to vector<8x128xbf16>
    %c0_15 = arith.constant 0 : index
    %c0_16 = arith.constant 0 : index
    %23 = vector.load %arg8[%c0_15, %c0_16] : memref<128x16xbf16, #tpu.memory_space<vmem>>, vector<128x16xbf16>
    %cst_17 = arith.constant dense<0.000000e+00> : vector<8x16xf32>
    %24 = tpu.matmul %22, %23, %cst_17 {dimension_numbers = #tpu.dot_dimension_numbers<[1], [0], [0], [1], [0, 0, 1, 1], [], []>} : vector<8x128xbf16>, vector<128x16xbf16>, vector<8x16xf32> -> vector<8x16xf32>
    %c0_18 = arith.constant 0 : index
    %c0_19 = arith.constant 0 : index
    %25 = vector.load %arg9[%c0_18, %c0_19] : memref<1x16xf32, #tpu.memory_space<vmem>>, vector<1x16xf32>
    %26 = vector.broadcast %25 : vector<1x16xf32> to vector<8x16xf32>
    %27 = arith.addf %24, %26 : vector<8x16xf32>
    %28 = math.tanh %27 : vector<8x16xf32>
    %cst_20 = arith.constant 5.000000e-01 : f32
    %29 = vector.broadcast %cst_20 : f32 to vector<8x16xf32>
    %30 = arith.mulf %29, %28 : vector<8x16xf32>
    %31 = math.tanh %30 : vector<8x16xf32>
    %cst_21 = arith.constant 1.000000e+00 : f32
    %32 = vector.broadcast %cst_21 : f32 to vector<8x16xf32>
    %33 = arith.addf %31, %32 : vector<8x16xf32>
    %cst_22 = arith.constant 5.000000e-01 : f32
    %34 = vector.broadcast %cst_22 : f32 to vector<8x16xf32>
    %35 = arith.mulf %34, %33 : vector<8x16xf32>
    %c0_23 = arith.constant 0 : index
    %c0_24 = arith.constant 0 : index
    %36 = vector.load %arg10[%c0_23, %c0_24] : memref<8x16xf32, #tpu.memory_space<vmem>>, vector<8x16xf32>
    tpu.vector_store %arg10[%c0_23, %c0_24], %35 {strides = array<i32>} : memref<8x16xf32, #tpu.memory_space<vmem>>, vector<8x16xf32>,
    return
  }
  func.func @transform_0(%arg0: i32) -> (i32, i32) {
    %c0_i32 = arith.constant 0 : i32
    %c0_i32_0 = arith.constant 0 : i32
    return %arg0, %c0_i32 : i32, i32
  }
  func.func @transform_1(%arg0: i32) -> (i32, i32) {
    %c0_i32 = arith.constant 0 : i32
    %c0_i32_0 = arith.constant 0 : i32
    %c0_i32_1 = arith.constant 0 : i32
    return %c0_i32, %c0_i32_0 : i32, i32
  }
  func.func @transform_2(%arg0: i32) -> (i32, i32) {
    %c0_i32 = arith.constant 0 : i32
    %c0_i32_0 = arith.constant 0 : i32
    %c0_i32_1 = arith.constant 0 : i32
    return %c0_i32, %c0_i32_0 : i32, i32
  }
  func.func @transform_3(%arg0: i32) -> (i32, i32) {
    %c0_i32 = arith.constant 0 : i32
    %c0_i32_0 = arith.constant 0 : i32
    %c0_i32_1 = arith.constant 0 : i32
    return %c0_i32, %c0_i32_0 : i32, i32
  }
  func.func @transform_4(%arg0: i32) -> (i32, i32) {
    %c0_i32 = arith.constant 0 : i32
    %c0_i32_0 = arith.constant 0 : i32
    %c0_i32_1 = arith.constant 0 : i32
    return %c0_i32, %c0_i32_0 : i32, i32
  }
  func.func @transform_5(%arg0: i32) -> (i32, i32) {
    %c0_i32 = arith.constant 0 : i32
    %c0_i32_0 = arith.constant 0 : i32
    %c0_i32_1 = arith.constant 0 : i32
    return %c0_i32, %c0_i32_0 : i32, i32
  }
  func.func @transform_6(%arg0: i32) -> (i32, i32) {
    %c0_i32 = arith.constant 0 : i32
    %c0_i32_0 = arith.constant 0 : i32
    %c0_i32_1 = arith.constant 0 : i32
    return %c0_i32, %c0_i32_0 : i32, i32
  }
  func.func @transform_7(%arg0: i32) -> (i32, i32) {
    %c0_i32 = arith.constant 0 : i32
    %c0_i32_0 = arith.constant 0 : i32
    %c0_i32_1 = arith.constant 0 : i32
    return %c0_i32, %c0_i32_0 : i32, i32
  }
  func.func @transform_8(%arg0: i32) -> (i32, i32) {
    %c0_i32 = arith.constant 0 : i32
    %c0_i32_0 = arith.constant 0 : i32
    %c0_i32_1 = arith.constant 0 : i32
    return %c0_i32, %c0_i32_0 : i32, i32
  }
  func.func @transform_9(%arg0: i32) -> (i32, i32) {
    %c0_i32 = arith.constant 0 : i32
    %c0_i32_0 = arith.constant 0 : i32
    return %arg0, %c0_i32 : i32, i32
  }
}

</mosaic_0001>

<llo_original>
// kernel: feedforward_mlp.1
$region0: #{feedforward_mlp.1}
  #allocation0 [shape = 'u32[]', space=smem, size = 0x4, offset = 0x4, fixed_abs, tag = 'smem constant byte address 0x4 - core index']
  #allocation1 [shape = 'u32[144,128]{1,0:T(1,128)}', space=vmem, size = 0x12000, scoped, tag = 'internal scratch']
  %s0 = inlined_call_operand.hbm [shape: f32[8,32], index: 0, kind: input, shape index: {}]
  %s1 = inlined_call_operand.vmem [shape: bf16[32,128], index: 1, kind: input, shape index: {}]
  %s2 = inlined_call_operand.vmem [shape: f32[1,128], index: 2, kind: input, shape index: {}]
  %s3 = inlined_call_operand.vmem [shape: bf16[128,128], index: 3, kind: input, shape index: {}]
  %s4 = inlined_call_operand.vmem [shape: f32[1,128], index: 4, kind: input, shape index: {}]
  %s5 = inlined_call_operand.hbm [shape: bf16[128,128], index: 5, kind: input, shape index: {}]
  %s6 = inlined_call_operand.hbm [shape: f32[1,128], index: 6, kind: input, shape index: {}]
  %s7 = inlined_call_operand.vmem [shape: bf16[128,16], index: 7, kind: input, shape index: {}]
  %s8 = inlined_call_operand.hbm [shape: f32[1,16], index: 8, kind: input, shape index: {}]
  %s9 = inlined_call_operand.hbm [shape: f32[8,16], index: 9, kind: output, shape index: {}]
  %s10 = sld [smem:[#allocation0]]
  $region62: #{feedforward_mlp.1} parent=0
    _
  %s12 = ssub.s32 1, %s10
  %s13 = scalar_select 0, %s12, %s10
  $region1: #{feedforward_mlp.1} parent=0
    #allocation2 [shape = 'u8[4096]{0}', space=vmem, size = 0x1000, scoped, tag = 'input window, operand 0, single buffered']
    #allocation3 [shape = 's32[1]{0}', space=sflag, size = 0x4, scoped, tag = 'scoped memory for feedforward_mlp.1']
    #allocation4 [shape = 's32[1]{0}', space=sflag, size = 0x4, scoped, tag = 'scoped memory for feedforward_mlp.1']
    #allocation5 [shape = 'u8[32768]{0}', space=vmem, size = 0x8000, scoped, tag = 'input window, operand 5, single buffered']
    #allocation6 [shape = 's32[1]{0}', space=sflag, size = 0x4, scoped, tag = 'scoped memory for feedforward_mlp.1']
    #allocation7 [shape = 'u8[512]{0}', space=vmem, size = 0x400, scoped, tag = 'input window, operand 6, single buffered']
    #allocation8 [shape = 'u8[512]{0}', space=vmem, size = 0x400, scoped, tag = 'input window, operand 8, single buffered']
    #allocation9 [shape = 's32[1]{0}', space=sflag, size = 0x4, scoped, tag = 'scoped memory for feedforward_mlp.1']
    #allocation10 [shape = 'u8[4096]{0}', space=vmem, size = 0x1000, scoped, tag = 'output window, operand 0, single buffered']
    %14 = vsyncpa [#allocation3], 0
    %15 = vsyncpa [#allocation6], 0
    %16 = vsyncpa [#allocation9], 0
    %17 = vsyncpa [#allocation4], 0
    // Predicated region
    $region2: #{feedforward_mlp.1} parent=1 // pred_check
      _
    $region3: #{feedforward_mlp.1} parent=1 // pred_check_branch
      %19 = sbr.rel (0) target = $region5
    $region4: #{feedforward_mlp.1} parent=1 // pred_region
      %s21 = ssub.s32 128, 128
      %22 = vsyncadd [#allocation3], %s21
      %s24 = sshll.u32 [#allocation2], 4
      %s25 = int_to_ptr.vmem [resolvable:$true] %s24
      %27 = dma.hbm_to_vmem [thread:$0]  %s0, 128, %s25, [#allocation3]
    $region5: #{feedforward_mlp.1} parent=1 // pred_fallthru
      _
    // Predicated region
    $region6: #{feedforward_mlp.1} parent=1 // pred_check
      _
    $region7: #{feedforward_mlp.1} parent=1 // pred_check_branch
      %29 = sbr.rel (0) target = $region9
    $region8: #{feedforward_mlp.1} parent=1 // pred_region
      _
    $region9: #{feedforward_mlp.1} parent=1 // pred_fallthru
      _
    // Predicated region
    $region10: #{feedforward_mlp.1} parent=1 // pred_check
      _
    $region11: #{feedforward_mlp.1} parent=1 // pred_check_branch
      %31 = sbr.rel (0) target = $region13
    $region12: #{feedforward_mlp.1} parent=1 // pred_region
      _
    $region13: #{feedforward_mlp.1} parent=1 // pred_fallthru
      _
    // Predicated region
    $region14: #{feedforward_mlp.1} parent=1 // pred_check
      _
    $region15: #{feedforward_mlp.1} parent=1 // pred_check_branch
      %33 = sbr.rel (0) target = $region17
    $region16: #{feedforward_mlp.1} parent=1 // pred_region
      _
    $region17: #{feedforward_mlp.1} parent=1 // pred_fallthru
      _
    // Predicated region
    $region18: #{feedforward_mlp.1} parent=1 // pred_check
      _
    $region19: #{feedforward_mlp.1} parent=1 // pred_check_branch
      %35 = sbr.rel (0) target = $region21
    $region20: #{feedforward_mlp.1} parent=1 // pred_region
      _
    $region21: #{feedforward_mlp.1} parent=1 // pred_fallthru
      _
    // Predicated region
    $region22: #{feedforward_mlp.1} parent=1 // pred_check
      _
    $region23: #{feedforward_mlp.1} parent=1 // pred_check_branch
      %37 = sbr.rel (0) target = $region25
    $region24: #{feedforward_mlp.1} parent=1 // pred_region
      %s39 = ssub.s32 1024, 1024
      %40 = vsyncadd [#allocation6], %s39
      %s41 = sshll.u32 [#allocation5], 4
      %s42 = int_to_ptr.vmem [resolvable:$true] %s41
      %47 = dma.hbm_to_vmem [thread:$0]  %s5, 1024, %s42, [#allocation6], 64, 64, 4
    $region25: #{feedforward_mlp.1} parent=1 // pred_fallthru
      _
    // Predicated region
    $region26: #{feedforward_mlp.1} parent=1 // pred_check
      _
    $region27: #{feedforward_mlp.1} parent=1 // pred_check_branch
      %49 = sbr.rel (0) target = $region29
    $region28: #{feedforward_mlp.1} parent=1 // pred_region
      %s51 = ssub.s32 16, 16
      %52 = vsyncadd [#allocation6], %s51
      %s54 = sshll.u32 [#allocation7], 4
      %s55 = int_to_ptr.vmem [resolvable:$true] %s54
      %57 = dma.hbm_to_vmem [thread:$0]  %s6, 16, %s55, [#allocation6]
    $region29: #{feedforward_mlp.1} parent=1 // pred_fallthru
      _
    // Predicated region
    $region30: #{feedforward_mlp.1} parent=1 // pred_check
      _
    $region31: #{feedforward_mlp.1} parent=1 // pred_check_branch
      %59 = sbr.rel (0) target = $region33
    $region32: #{feedforward_mlp.1} parent=1 // pred_region
      _
    $region33: #{feedforward_mlp.1} parent=1 // pred_fallthru
      _
    // Predicated region
    $region34: #{feedforward_mlp.1} parent=1 // pred_check
      _
    $region35: #{feedforward_mlp.1} parent=1 // pred_check_branch
      %61 = sbr.rel (0) target = $region37
    $region36: #{feedforward_mlp.1} parent=1 // pred_region
      %s63 = ssub.s32 16, 16
      %64 = vsyncadd [#allocation9], %s63
      %s66 = sshll.u32 [#allocation8], 4
      %s67 = int_to_ptr.vmem [resolvable:$true] %s66
      %69 = dma.hbm_to_vmem [thread:$0]  %s8, 16, %s67, [#allocation9]
    $region37: #{feedforward_mlp.1} parent=1 // pred_fallthru
      _
    // Predicated region
    $region38: #{feedforward_mlp.1} parent=1 // pred_check
      _
    $region39: #{feedforward_mlp.1} parent=1 // pred_check_branch
      %71 = sbr.rel (0) target = $region41
    $region40: #{feedforward_mlp.1} parent=1 // pred_region
      %72 = dma.done [#allocation3], 128
    $region41: #{feedforward_mlp.1} parent=1 // pred_fallthru
      _
    // Predicated region
    $region42: #{feedforward_mlp.1} parent=1 // pred_check
      _
    $region43: #{feedforward_mlp.1} parent=1 // pred_check_branch
      %74 = sbr.rel (0) target = $region45
    $region44: #{feedforward_mlp.1} parent=1 // pred_region
      %75 = dma.done [#allocation6], 1024
    $region45: #{feedforward_mlp.1} parent=1 // pred_fallthru
      _
    // Predicated region
    $region46: #{feedforward_mlp.1} parent=1 // pred_check
      _
    $region47: #{feedforward_mlp.1} parent=1 // pred_check_branch
      %77 = sbr.rel (0) target = $region49
    $region48: #{feedforward_mlp.1} parent=1 // pred_region
      %78 = dma.done [#allocation6], 16
    $region49: #{feedforward_mlp.1} parent=1 // pred_fallthru
      _
    // Predicated region
    $region50: #{feedforward_mlp.1} parent=1 // pred_check
      _
    $region51: #{feedforward_mlp.1} parent=1 // pred_check_branch
      %80 = sbr.rel (0) target = $region53
    $region52: #{feedforward_mlp.1} parent=1 // pred_region
      %81 = dma.done [#allocation9], 16
    $region53: #{feedforward_mlp.1} parent=1 // pred_fallthru
      _
    %v83 = vld [vmem:[#allocation2] sm:$0xff]
    %v84 = vpack.c.bf16 %v83, %v83
    %v85 = vld [vmem:[%s1] sm:$0xf]
    %v86 = vld [vmem:[%s1 + $0x4] sm:$0xf]
    %v87 = vld [vmem:[%s1 + $0x8] sm:$0xf]
    %v88 = vld [vmem:[%s1 + $0xc] sm:$0xf]
    %v89 = vld [vmem:[%s2] sm:$0x1]
    %v91 = vlaneseq
    %v92 = vshrl.u32 %v91, 7
    %v93 = vsub.s32 0, %v92
    %v94 = vrot.slane %v89, %v93
    %v100 = vunpack.c.l.b16 %v85
    %v101 = vunpack.c.l.b16 %v86
    %v102 = vunpack.c.l.b16 %v87
    %v103 = vunpack.c.l.b16 %v88
    %v104 = vpack.c.b16 %v101, %v100
    %v105 = vpack.c.b16 %v103, %v102
    %vm108 = vcmask 261120
    %v110 = vsel %vm108, %v84, 0
    %112 = vmatprep.subr.bf16.mxu0 0
    %113 = vmatpush1.bf16.msra.mxu0 0
    %114 = vmatprep.subr.bf16.mxu0 0
    %115 = vmatpush1.bf16.msra.mxu0 0
    %116 = vmatprep.subr.bf16.mxu0 0
    %117 = vmatpush1.bf16.msra.mxu0 0
    %118 = vmatprep.subr.bf16.mxu0 0
    %119 = vmatpush1.bf16.msra.mxu0 0
    %120 = vmatprep.subr.bf16.mxu0 0
    %121 = vmatpush1.bf16.msra.mxu0 0
    %122 = vmatprep.subr.bf16.mxu0 0
    %123 = vmatpush1.bf16.msra.mxu0 0
    %124 = vmatprep.subr.bf16.mxu0 0
    %125 = vmatpush1.bf16.msra.mxu0 %v105
    %126 = vmatprep.subr.bf16.mxu0 0
    %127 = vmatpush1.bf16.msra.mxu0 %v104
    %128 = vmatprep.subr.bf16.mxu0 0
    %129 = vmatpush2.bf16.msra.mxu0 0
    %130 = vmatprep.subr.bf16.mxu0 0
    %131 = vmatpush2.bf16.msra.mxu0 0
    %132 = vmatprep.subr.bf16.mxu0 0
    %133 = vmatpush2.bf16.msra.mxu0 0
    %134 = vmatprep.subr.bf16.mxu0 0
    %135 = vmatpush2.bf16.msra.mxu0 0
    %136 = vmatprep.subr.bf16.mxu0 0
    %137 = vmatpush2.bf16.msra.mxu0 0
    %138 = vmatprep.subr.bf16.mxu0 0
    %139 = vmatpush2.bf16.msra.mxu0 0
    %140 = vmatprep.subr.bf16.mxu0 0
    %141 = vmatpush2.bf16.msra.mxu0 0
    %142 = vmatprep.subr.bf16.mxu0 0
    %143 = vmatpush2.bf16.msra.mxu0 0
    %144 = vmatprep.mubr.bf16.mxu0 0
    %145 = vmatmul.mubr.bf16.gmra.mxu0 %v110
    %v146 = vpop.f32.mrf.mxu0
    %v147 = vadd.f32 %v94, %v146
    %v148 = vpop.f32.mrf.mxu0
    %v149 = vpop.f32.mrf.mxu0
    %v150 = vpop.f32.mrf.mxu0
    %151 = vdwg.mxu0
    %v152 = vtanh.pop %v147
    %v153 = vpack.c.bf16 %v152, %v152
    %v154 = vld [vmem:[%s3] sm:$0xf]
    %v155 = vld [vmem:[%s3 + $0x4] sm:$0xf]
    %v156 = vld [vmem:[%s3 + $0x8] sm:$0xf]
    %v157 = vld [vmem:[%s3 + $0xc] sm:$0xf]
    %v158 = vld [vmem:[%s3 + $0x10] sm:$0xf]
    %v159 = vld [vmem:[%s3 + $0x14] sm:$0xf]
    %v160 = vld [vmem:[%s3 + $0x18] sm:$0xf]
    %v161 = vld [vmem:[%s3 + $0x1c] sm:$0xf]
    %v162 = vld [vmem:[%s3 + $0x20] sm:$0xf]
    %v163 = vld [vmem:[%s3 + $0x24] sm:$0xf]
    %v164 = vld [vmem:[%s3 + $0x28] sm:$0xf]
    %v165 = vld [vmem:[%s3 + $0x2c] sm:$0xf]
    %v166 = vld [vmem:[%s3 + $0x30] sm:$0xf]
    %v167 = vld [vmem:[%s3 + $0x34] sm:$0xf]
    %v168 = vld [vmem:[%s3 + $0x38] sm:$0xf]
    %v169 = vld [vmem:[%s3 + $0x3c] sm:$0xf]
    %v170 = vld [vmem:[%s4] sm:$0x1]
    %v172 = vlaneseq
    %v173 = vshrl.u32 %v172, 7
    %v174 = vsub.s32 0, %v173
    %v175 = vrot.slane %v170, %v174
    %v193 = vunpack.c.l.b16 %v154
    %v194 = vunpack.c.l.b16 %v155
    %v195 = vunpack.c.l.b16 %v156
    %v196 = vunpack.c.l.b16 %v157
    %v197 = vunpack.c.l.b16 %v158
    %v198 = vunpack.c.l.b16 %v159
    %v199 = vunpack.c.l.b16 %v160
    %v200 = vunpack.c.l.b16 %v161
    %v201 = vunpack.c.l.b16 %v162
    %v202 = vunpack.c.l.b16 %v163
    %v203 = vunpack.c.l.b16 %v164
    %v204 = vunpack.c.l.b16 %v165
    %v205 = vunpack.c.l.b16 %v166
    %v206 = vunpack.c.l.b16 %v167
    %v207 = vunpack.c.l.b16 %v168
    %v208 = vunpack.c.l.b16 %v169
    %v209 = vpack.c.b16 %v194, %v193
    %v210 = vpack.c.b16 %v196, %v195
    %v211 = vpack.c.b16 %v198, %v197
    %v212 = vpack.c.b16 %v200, %v199
    %v213 = vpack.c.b16 %v202, %v201
    %v214 = vpack.c.b16 %v204, %v203
    %v215 = vpack.c.b16 %v206, %v205
    %v216 = vpack.c.b16 %v208, %v207
    %225 = vmatprep.subr.bf16.mxu0 0
    %226 = vmatpush1.bf16.msra.mxu0 %v216
    %227 = vmatprep.subr.bf16.mxu0 0
    %228 = vmatpush1.bf16.msra.mxu0 %v215
    %229 = vmatprep.subr.bf16.mxu0 0
    %230 = vmatpush1.bf16.msra.mxu0 %v214
    %231 = vmatprep.subr.bf16.mxu0 0
    %232 = vmatpush1.bf16.msra.mxu0 %v213
    %233 = vmatprep.subr.bf16.mxu0 0
    %234 = vmatpush1.bf16.msra.mxu0 %v212
    %235 = vmatprep.subr.bf16.mxu0 0
    %236 = vmatpush1.bf16.msra.mxu0 %v211
    %237 = vmatprep.subr.bf16.mxu0 0
    %238 = vmatpush1.bf16.msra.mxu0 %v210
    %239 = vmatprep.subr.bf16.mxu0 0
    %240 = vmatpush1.bf16.msra.mxu0 %v209
    %241 = vmatprep.subr.bf16.mxu0 0
    %242 = vmatpush2.bf16.msra.mxu0 0
    %243 = vmatprep.subr.bf16.mxu0 0
    %244 = vmatpush2.bf16.msra.mxu0 0
    %245 = vmatprep.subr.bf16.mxu0 0
    %246 = vmatpush2.bf16.msra.mxu0 0
    %247 = vmatprep.subr.bf16.mxu0 0
    %248 = vmatpush2.bf16.msra.mxu0 0
    %249 = vmatprep.subr.bf16.mxu0 0
    %250 = vmatpush2.bf16.msra.mxu0 0
    %251 = vmatprep.subr.bf16.mxu0 0
    %252 = vmatpush2.bf16.msra.mxu0 0
    %253 = vmatprep.subr.bf16.mxu0 0
    %254 = vmatpush2.bf16.msra.mxu0 0
    %255 = vmatprep.subr.bf16.mxu0 0
    %256 = vmatpush2.bf16.msra.mxu0 0
    %257 = vmatprep.mubr.bf16.mxu0 0
    %258 = vmatmul.mubr.bf16.gmra.mxu0 %v153
    %v259 = vpop.f32.mrf.mxu0
    %v260 = vadd.f32 %v175, %v259
    %v261 = vpop.f32.mrf.mxu0
    %v262 = vpop.f32.mrf.mxu0
    %v263 = vpop.f32.mrf.mxu0
    %264 = vdwg.mxu0
    %v265 = vtanh.pop %v260
    %v266 = vpack.c.bf16 %v265, %v265
    %v267 = vld [vmem:[#allocation5] sm:$0xf]
    %v268 = vld [vmem:[#allocation5 + $0x4] sm:$0xf]
    %v269 = vld [vmem:[#allocation5 + $0x8] sm:$0xf]
    %v270 = vld [vmem:[#allocation5 + $0xc] sm:$0xf]
    %v271 = vld [vmem:[#allocation5 + $0x10] sm:$0xf]
    %v272 = vld [vmem:[#allocation5 + $0x14] sm:$0xf]
    %v273 = vld [vmem:[#allocation5 + $0x18] sm:$0xf]
    %v274 = vld [vmem:[#allocation5 + $0x1c] sm:$0xf]
    %v275 = vld [vmem:[#allocation5 + $0x20] sm:$0xf]
    %v276 = vld [vmem:[#allocation5 + $0x24] sm:$0xf]
    %v277 = vld [vmem:[#allocation5 + $0x28] sm:$0xf]
    %v278 = vld [vmem:[#allocation5 + $0x2c] sm:$0xf]
    %v279 = vld [vmem:[#allocation5 + $0x30] sm:$0xf]
    %v280 = vld [vmem:[#allocation5 + $0x34] sm:$0xf]
    %v281 = vld [vmem:[#allocation5 + $0x38] sm:$0xf]
    %v282 = vld [vmem:[#allocation5 + $0x3c] sm:$0xf]
    %v283 = vld [vmem:[#allocation7] sm:$0x1]
    %v285 = vlaneseq
    %v286 = vshrl.u32 %v285, 7
    %v287 = vsub.s32 0, %v286
    %v288 = vrot.slane %v283, %v287
    %v306 = vunpack.c.l.b16 %v267
    %v307 = vunpack.c.l.b16 %v268
    %v308 = vunpack.c.l.b16 %v269
    %v309 = vunpack.c.l.b16 %v270
    %v310 = vunpack.c.l.b16 %v271
    %v311 = vunpack.c.l.b16 %v272
    %v312 = vunpack.c.l.b16 %v273
    %v313 = vunpack.c.l.b16 %v274
    %v314 = vunpack.c.l.b16 %v275
    %v315 = vunpack.c.l.b16 %v276
    %v316 = vunpack.c.l.b16 %v277
    %v317 = vunpack.c.l.b16 %v278
    %v318 = vunpack.c.l.b16 %v279
    %v319 = vunpack.c.l.b16 %v280
    %v320 = vunpack.c.l.b16 %v281
    %v321 = vunpack.c.l.b16 %v282
    %v322 = vpack.c.b16 %v307, %v306
    %v323 = vpack.c.b16 %v309, %v308
    %v324 = vpack.c.b16 %v311, %v310
    %v325 = vpack.c.b16 %v313, %v312
    %v326 = vpack.c.b16 %v315, %v314
    %v327 = vpack.c.b16 %v317, %v316
    %v328 = vpack.c.b16 %v319, %v318
    %v329 = vpack.c.b16 %v321, %v320
    %338 = vmatprep.subr.bf16.mxu0 0
    %339 = vmatpush1.bf16.msra.mxu0 %v329
    %340 = vmatprep.subr.bf16.mxu0 0
    %341 = vmatpush1.bf16.msra.mxu0 %v328
    %342 = vmatprep.subr.bf16.mxu0 0
    %343 = vmatpush1.bf16.msra.mxu0 %v327
    %344 = vmatprep.subr.bf16.mxu0 0
    %345 = vmatpush1.bf16.msra.mxu0 %v326
    %346 = vmatprep.subr.bf16.mxu0 0
    %347 = vmatpush1.bf16.msra.mxu0 %v325
    %348 = vmatprep.subr.bf16.mxu0 0
    %349 = vmatpush1.bf16.msra.mxu0 %v324
    %350 = vmatprep.subr.bf16.mxu0 0
    %351 = vmatpush1.bf16.msra.mxu0 %v323
    %352 = vmatprep.subr.bf16.mxu0 0
    %353 = vmatpush1.bf16.msra.mxu0 %v322
    %354 = vmatprep.subr.bf16.mxu0 0
    %355 = vmatpush2.bf16.msra.mxu0 0
    %356 = vmatprep.subr.bf16.mxu0 0
    %357 = vmatpush2.bf16.msra.mxu0 0
    %358 = vmatprep.subr.bf16.mxu0 0
    %359 = vmatpush2.bf16.msra.mxu0 0
    %360 = vmatprep.subr.bf16.mxu0 0
    %361 = vmatpush2.bf16.msra.mxu0 0
    %362 = vmatprep.subr.bf16.mxu0 0
    %363 = vmatpush2.bf16.msra.mxu0 0
    %364 = vmatprep.subr.bf16.mxu0 0
    %365 = vmatpush2.bf16.msra.mxu0 0
    %366 = vmatprep.subr.bf16.mxu0 0
    %367 = vmatpush2.bf16.msra.mxu0 0
    %368 = vmatprep.subr.bf16.mxu0 0
    %369 = vmatpush2.bf16.msra.mxu0 0
    %370 = vmatprep.mubr.bf16.mxu0 0
    %371 = vmatmul.mubr.bf16.gmra.mxu0 %v266
    %v372 = vpop.f32.mrf.mxu0
    %v373 = vadd.f32 %v288, %v372
    %v374 = vpop.f32.mrf.mxu0
    %v375 = vpop.f32.mrf.mxu0
    %v376 = vpop.f32.mrf.mxu0
    %377 = vdwg.mxu0
    %v378 = vtanh.pop %v373
    %v379 = vpack.c.bf16 %v378, %v378
    %v380 = vld [vmem:[%s7] sm:$0xf]
    %v381 = vld [vmem:[%s7 + $0x4] sm:$0xf]
    %v382 = vld [vmem:[%s7 + $0x8] sm:$0xf]
    %v383 = vld [vmem:[%s7 + $0xc] sm:$0xf]
    %v384 = vld [vmem:[%s7 + $0x10] sm:$0xf]
    %v385 = vld [vmem:[%s7 + $0x14] sm:$0xf]
    %v386 = vld [vmem:[%s7 + $0x18] sm:$0xf]
    %v387 = vld [vmem:[%s7 + $0x1c] sm:$0xf]
    %v388 = vld [vmem:[%s7 + $0x20] sm:$0xf]
    %v389 = vld [vmem:[%s7 + $0x24] sm:$0xf]
    %v390 = vld [vmem:[%s7 + $0x28] sm:$0xf]
    %v391 = vld [vmem:[%s7 + $0x2c] sm:$0xf]
    %v392 = vld [vmem:[%s7 + $0x30] sm:$0xf]
    %v393 = vld [vmem:[%s7 + $0x34] sm:$0xf]
    %v394 = vld [vmem:[%s7 + $0x38] sm:$0xf]
    %v395 = vld [vmem:[%s7 + $0x3c] sm:$0xf]
    %v396 = vld [vmem:[#allocation8] sm:$0x1]
    %v398 = vlaneseq
    %v399 = vshrl.u32 %v398, 7
    %v400 = vsub.s32 0, %v399
    %v401 = vrot.slane %v396, %v400
    %v419 = vunpack.c.l.b16 %v380
    %v420 = vunpack.c.l.b16 %v381
    %v421 = vunpack.c.l.b16 %v382
    %v422 = vunpack.c.l.b16 %v383
    %v423 = vunpack.c.l.b16 %v384
    %v424 = vunpack.c.l.b16 %v385
    %v425 = vunpack.c.l.b16 %v386
    %v426 = vunpack.c.l.b16 %v387
    %v427 = vunpack.c.l.b16 %v388
    %v428 = vunpack.c.l.b16 %v389
    %v429 = vunpack.c.l.b16 %v390
    %v430 = vunpack.c.l.b16 %v391
    %v431 = vunpack.c.l.b16 %v392
    %v432 = vunpack.c.l.b16 %v393
    %v433 = vunpack.c.l.b16 %v394
    %v434 = vunpack.c.l.b16 %v395
    %v435 = vpack.c.b16 %v420, %v419
    %v436 = vpack.c.b16 %v422, %v421
    %v437 = vpack.c.b16 %v424, %v423
    %v438 = vpack.c.b16 %v426, %v425
    %v439 = vpack.c.b16 %v428, %v427
    %v440 = vpack.c.b16 %v430, %v429
    %v441 = vpack.c.b16 %v432, %v431
    %v442 = vpack.c.b16 %v434, %v433
    %451 = vmatprep.subr.bf16.mxu0 0
    %452 = vmatpush1.bf16.msra.mxu0 %v442
    %453 = vmatprep.subr.bf16.mxu0 0
    %454 = vmatpush1.bf16.msra.mxu0 %v441
    %455 = vmatprep.subr.bf16.mxu0 0
    %456 = vmatpush1.bf16.msra.mxu0 %v440
    %457 = vmatprep.subr.bf16.mxu0 0
    %458 = vmatpush1.bf16.msra.mxu0 %v439
    %459 = vmatprep.subr.bf16.mxu0 0
    %460 = vmatpush1.bf16.msra.mxu0 %v438
    %461 = vmatprep.subr.bf16.mxu0 0
    %462 = vmatpush1.bf16.msra.mxu0 %v437
    %463 = vmatprep.subr.bf16.mxu0 0
    %464 = vmatpush1.bf16.msra.mxu0 %v436
    %465 = vmatprep.subr.bf16.mxu0 0
    %466 = vmatpush1.bf16.msra.mxu0 %v435
    %467 = vmatprep.subr.bf16.mxu0 0
    %468 = vmatpush2.bf16.msra.mxu0 0
    %469 = vmatprep.subr.bf16.mxu0 0
    %470 = vmatpush2.bf16.msra.mxu0 0
    %471 = vmatprep.subr.bf16.mxu0 0
    %472 = vmatpush2.bf16.msra.mxu0 0
    %473 = vmatprep.subr.bf16.mxu0 0
    %474 = vmatpush2.bf16.msra.mxu0 0
    %475 = vmatprep.subr.bf16.mxu0 0
    %476 = vmatpush2.bf16.msra.mxu0 0
    %477 = vmatprep.subr.bf16.mxu0 0
    %478 = vmatpush2.bf16.msra.mxu0 0
    %479 = vmatprep.subr.bf16.mxu0 0
    %480 = vmatpush2.bf16.msra.mxu0 0
    %481 = vmatprep.subr.bf16.mxu0 0
    %482 = vmatpush2.bf16.msra.mxu0 0
    %483 = vmatprep.mubr.bf16.mxu0 0
    %484 = vmatmul.mubr.bf16.gmra.mxu0 %v379
    %v485 = vpop.f32.mrf.mxu0
    %v486 = vadd.f32 %v401, %v485
    %v487 = vpop.f32.mrf.mxu0
    %v488 = vpop.f32.mrf.mxu0
    %v489 = vpop.f32.mrf.mxu0
    %490 = vdwg.mxu0
    %v491 = vtanh.pop %v486
    %v492 = vmul.f32 %v491, 0.5
    %v493 = vtanh.pop %v492
    %v494 = vadd.f32 %v493, 1.0
    %v495 = vmul.f32 %v494, 0.5
    %vm496 = vcmask 130048
    %497 = vst.msk [vmem:[#allocation10] sm:$0xff] %vm496, %v495
    // Predicated region
    $region54: #{feedforward_mlp.1} parent=1 // pred_check
      _
    $region55: #{feedforward_mlp.1} parent=1 // pred_check_branch
      %499 = sbr.rel (0) target = $region57
    $region56: #{feedforward_mlp.1} parent=1 // pred_region
      %s501 = ssub.s32 128, 128
      %502 = vsyncadd [#allocation4], %s501
      %s504 = sshll.u32 [#allocation10], 4
      %s505 = int_to_ptr.vmem [resolvable:$true] %s504
      %507 = dma.vmem_to_hbm [thread:$0]  %s505, 128, %s9, [#allocation4]
    $region57: #{feedforward_mlp.1} parent=1 // pred_fallthru
      _
    // Predicated region
    $region58: #{feedforward_mlp.1} parent=1 // pred_check
      _
    $region59: #{feedforward_mlp.1} parent=1 // pred_check_branch
      %509 = sbr.rel (0) target = $region61
    $region60: #{feedforward_mlp.1} parent=1 // pred_region
      %510 = dma.done [#allocation4], 128
    $region61: #{feedforward_mlp.1} parent=1 // pred_fallthru
      _
    %511 = vsyncpa [#allocation3], 1
    %512 = vsyncpa [#allocation6], 1
    %513 = vsyncpa [#allocation9], 1
    %514 = vsyncpa [#allocation4], 1

</llo_original>
